<compile_context>
chip_gen: v6e
topology: v6e:2x2x1
jax: 0.10.0
libtpu: 0.0.40
codegen_flags: <defaults>
</compile_context>

<pallas_src>
import math

import jax
import jax.numpy as jnp
from jax.experimental import pallas as pl
from jax.experimental.pallas import tpu as pltpu

WAVELENGTH = 0.785
DELTA_X = 1.0
DELTA_Y = 1.0


# ----------------------------------------------------------------------------
# Generation-aware VMEM budget
# ----------------------------------------------------------------------------
def _vmem_budget_bytes():
    phys = 64 * 1024 * 1024                      # conservative default (v7x per-core)
    try:
        info = pltpu.get_tpu_info()
        phys = int(getattr(info, "vmem_capacity_bytes", phys))
    except Exception:
        pass
    # Leave headroom for Mosaic-internal scratch.
    return max(16 * 1024 * 1024, (phys * 3) // 4)


_VMEM_BUDGET = _vmem_budget_bytes()


def _pick_row_chunk(h, w, n_bufs, vmem_budget):
    """Largest multiple-of-8 divisor of h such that n_bufs float32 buffers of
    (th, w) stay within ~half the VMEM budget.  Falls back to the full extent h
    (always a legal block) when h has no suitable divisor."""
    bytes_per_row = n_bufs * w * 4
    max_rows = max(8, (vmem_budget // 2) // max(bytes_per_row, 1))
    best = 0
    th = 8
    while th <= min(h, max_rows):
        if h % th == 0:
            best = th
        th += 8
    return best if best > 0 else h


# ----------------------------------------------------------------------------
# Parameter setup (glue): angular-spectrum propagator, deterministic from (N, z)
# ----------------------------------------------------------------------------
def propagator(n, z, wavelength=WAVELENGTH, dx=DELTA_X, dy=DELTA_Y):
    """Returns (real, imag) of exp(i*2*pi*z*sqrt(k^2 - kp^2)), each (n, n) float32."""
    k = 1.0 / wavelength
    fx = jnp.arange(math.ceil(-n / 2), math.ceil(n / 2), 1, dtype=jnp.float32) * (1.0 / (n * dx))
    fy = jnp.arange(math.ceil(-n / 2), math.ceil(n / 2), 1, dtype=jnp.float32) * (1.0 / (n * dy))
    x_new = jnp.broadcast_to(fx[None, :], (n, n))
    y_new = jnp.broadcast_to(fy[:, None], (n, n))
    kp = jnp.sqrt(y_new ** 2 + x_new ** 2)
    term = jnp.maximum(k ** 2 - kp ** 2, 0.0)
    phase = 2.0 * jnp.pi * z * jnp.sqrt(term)
    return jnp.cos(phase).astype(jnp.float32), jnp.sin(phase).astype(jnp.float32)


def _ifftshift2(p):
    """2-D ifftshift (roll by -(size//2) on both axes) of an (H, W) plane."""
    h, w = p.shape
    return jnp.roll(p, shift=(-(h // 2), -(w // 2)), axis=(0, 1))


# ----------------------------------------------------------------------------
# Pallas kernel 1: elementwise complex multiply with the pre-shifted propagator
# ----------------------------------------------------------------------------
def _prop_mult_kernel(fr_ref, fi_ref, pr_ref, pi_ref, gr_ref, gi_ref):
    fr = fr_ref[...]          # (1, TH, W)
    fi = fi_ref[...]
    pr = pr_ref[...]          # (TH, W), broadcast over the leading batch dim
    pi = pi_ref[...]
    gr_ref[...] = fr * pr - fi * pi
    gi_ref[...] = fr * pi + fi * pr


def _prop_mult(fr, fi, pr, pi, vmem_budget):
    b, h, w = fr.shape
    # 12 resident buffers: (fr, fi, gr, gi, pr, pi) double-buffered.
    th = _pick_row_chunk(h, w, n_bufs=12, vmem_budget=vmem_budget)
    n_chunks = h // th
    data = pl.BlockSpec((1, th, w), lambda r, bb: (bb, r, 0))
    prop = pl.BlockSpec((th, w), lambda r, bb: (r, 0))   # invariant in the inner loop
    return pl.pallas_call(
        _prop_mult_kernel,
        out_shape=(jax.ShapeDtypeStruct((b, h, w), jnp.float32),
                   jax.ShapeDtypeStruct((b, h, w), jnp.float32)),
        grid=(n_chunks, b),                               # batch innermost
        in_specs=[data, data, prop, prop],
        out_specs=(data, data),
        compiler_params=pltpu.CompilerParams(
            dimension_semantics=("parallel", "parallel"),
            vmem_limit_bytes=vmem_budget),
        cost_estimate=pl.CostEstimate(
            flops=6 * b * h * w,
            transcendentals=0,
            bytes_accessed=4 * (6 * b * h * w + 2 * h * w)),
    )(fr, fi, pr, pi)


# ----------------------------------------------------------------------------
# Pallas kernel 2: fused data-term + TV partial sums per (batch, row-chunk)
# ----------------------------------------------------------------------------
def _loss_partials_kernel(sr_ref, si_ref, yr_ref, xr_ref, xi_ref, out_ref):
    th = xr_ref.shape[1]
    w = xr_ref.shape[2]

    # Data term: sum | |S| - sqrt(y_real) | over this tile.
    sr = sr_ref[0]
    si = si_ref[0]
    yr = yr_ref[0]
    se = jnp.sqrt(sr * sr + si * si)
    data_p = jnp.sum(jnp.abs(se - jnp.sqrt(yr)))

    xr = xr_ref[0]            # (TH, W)
    xi = xi_ref[0]

    def tile_h_tv(p):
        # Cyclic adjacent-row diffs via an XLU sublane rotate, minus the wrap pair.
        # The set of squared diffs is identical for either rotate direction, so this
        # is exact regardless of the hardware rotate convention.  Cross-tile boundary
        # rows are added back in the wrapper.
        d = pltpu.roll(p, shift=1, axis=0) - p
        wrap = p[0:1, :] - p[th - 1:th, :]
        return jnp.sum(d * d) - jnp.sum(wrap * wrap)

    def tile_w_tv(p):
        # Mirrors the original module exactly: the PyTorch "w" TV term uses
        # w_x = channel dim (= 2), so it broadcast-subtracts column 0 from every
        # column; column 0's own diff is identically 0, so no mask is needed.
        d = p - p[:, 0:1]
        return jnp.sum(d * d)

    h_p = tile_h_tv(xr) + tile_h_tv(xi)
    w_p = tile_w_tv(xr) + tile_w_tv(xi)

    # Pack the three partials into rows 0/1/2 of this step's private (8, 128) tile.
    row = jax.lax.broadcasted_iota(jnp.int32, (8, 128), 0)
    tile = jnp.where(row == 0, data_p,
                     jnp.where(row == 1, h_p,
                               jnp.where(row == 2, w_p, 0.0)))
    out_ref[...] = tile[None, None].astype(jnp.float32)


def _loss_partials(sr, si, yr, xr, xi, vmem_budget):
    b, h, w = xr.shape
    # ~10 resident buffers: 5 input planes double-buffered (+ a tiny output tile).
    th = _pick_row_chunk(h, w, n_bufs=10, vmem_budget=vmem_budget)
    n_chunks = h // th
    data = pl.BlockSpec((1, th, w), lambda bb, r: (bb, r, 0))
    out = pl.BlockSpec((1, 1, 8, 128), lambda bb, r: (bb, r, 0, 0))
    partials = pl.pallas_call(
        _loss_partials_kernel,
        out_shape=jax.ShapeDtypeStruct((b, n_chunks, 8, 128), jnp.float32),
        grid=(b, n_chunks),
        in_specs=[data, data, data, data, data],
        out_specs=out,
        compiler_params=pltpu.CompilerParams(
            dimension_semantics=("parallel", "parallel"),
            vmem_limit_bytes=vmem_budget),
        cost_estimate=pl.CostEstimate(
            flops=20 * b * h * w,
            transcendentals=2 * b * h * w,
            bytes_accessed=4 * 5 * b * h * w),
    )(sr, si, yr, xr, xi)
    data_sum = jnp.sum(partials[:, :, 0, 0])
    h_sum = jnp.sum(partials[:, :, 1, 0])
    w_sum = jnp.sum(partials[:, :, 2, 0])
    return data_sum, h_sum, w_sum, th


# ----------------------------------------------------------------------------
# RECLoss forward (Pallas version)
# ----------------------------------------------------------------------------
@jax.jit
def _rec_loss_forward(x, y, pr_s, pi_s, lam):
    # x, y: (B, 2, 1, H, W) float32.
    x = jnp.squeeze(x, axis=2)                 # (B, 2, H, W)
    y = jnp.squeeze(y, axis=2)
    xr = x[:, 0].astype(jnp.float32)           # == x.permute(0,2,3,1)[..., 0]
    xi = x[:, 1].astype(jnp.float32)
    yr = y[:, 0].astype(jnp.float32)
    b, h, w = xr.shape

    # TODO(synk): 3-D fftn/ifftn over dims (0,1,2) (norm='ortho') has no Pallas/Mosaic
    # primitive; kept in jnp.fft (XLA), including the real/imag split & recombine.
    f = jnp.fft.fftn(xr + 1j * xi, axes=(0, 1, 2), norm="ortho")
    fr = jnp.real(f).astype(jnp.float32)
    fi = jnp.imag(f).astype(jnp.float32)

    gr, gi = _prop_mult(fr, fi, pr_s, pi_s, _VMEM_BUDGET)

    s = jnp.fft.ifftn(gr + 1j * gi, axes=(0, 1, 2), norm="ortho")
    sr = jnp.real(s).astype(jnp.float32)
    si = jnp.imag(s).astype(jnp.float32)

    data_sum, h_sum, w_sum, th = _loss_partials(sr, si, yr, xr, xi, _VMEM_BUDGET)

    # Cross-chunk boundary rows of the adjacent-row TV term (tiny; static branch).
    n_chunks = h // th
    if n_chunks > 1:
        cut = jnp.arange(1, n_chunks) * th
        bd_r = xr[:, cut, :] - xr[:, cut - 1, :]
        bd_i = xi[:, cut, :] - xi[:, cut - 1, :]
        h_sum = h_sum + jnp.sum(bd_r * bd_r) + jnp.sum(bd_i * bd_i)

    count_data = float(b * h * w)
    count_h = float((h - 1) * w * 2)
    count_w = float(h * (w - 1) * 2)
    data_term = data_sum / count_data * 0.5
    tv = 0.01 * 2.0 * (h_sum / count_h + w_sum / count_w) / float(b)
    return data_term + lam * tv


class RECLossPallas:
    """Pallas TPU port of DH_GAN's RECLoss.forward."""

    def __init__(self, z, image_size, wavelength=WAVELENGTH, dx=DELTA_X, dy=DELTA_Y):
        self.z = float(z)
        self.n = int(image_size)
        pr, pi = propagator(self.n, self.z, wavelength, dx, dy)
        self.prop_r, self.prop_i = pr, pi      # unshifted, kept for the reference check
        # Fold batch_fftshift2d / batch_ifftshift2d into the (static) propagator:
        #   ifftshift(fftshift(F) * P) == F * ifftshift(P)   (pure permutation identity).
        self.prop_r_s = _ifftshift2(pr)
        self.prop_i_s = _ifftshift2(pi)

    def __call__(self, x, y, mask, mylambda=0.0):
        del mask                               # unused, as in the PyTorch module
        b, c, d, h, w = x.shape
        assert c == 2 and d == 1 and h == w == self.n, (x.shape, self.n)
        # mylambda travels as traced data -> no recompile per lambda value.
        lam = jnp.float32(mylambda)
        return _rec_loss_forward(x, y, self.prop_r_s, self.prop_i_s, lam)


# ----------------------------------------------------------------------------
# Pure-JAX reference (literally mirrors the PyTorch forward) for verification
# ----------------------------------------------------------------------------
def reference_loss(x, y, mask, pr, pi, mylambda):
    x = jnp.transpose(jnp.squeeze(x, 2), (0, 2, 3, 1))   # (B, H, W, 2)
    y = jnp.transpose(jnp.squeeze(y, 2), (0, 2, 3, 1))
    xc = x[..., 0] + 1j * x[..., 1]
    f = jnp.fft.fftn(xc, axes=(0, 1, 2), norm="ortho")
    fr, fi = jnp.real(f), jnp.imag(f)

    def fftshift_bhw(a):
        for ax in (1, 2):
            n = a.shape[ax] // 2
            if a.shape[ax] % 2 != 0:
                n += 1
            a = jnp.roll(a, -n, axis=ax)
        return a

    def ifftshift_bhw(a):
        for ax in (2, 1):
            a = jnp.roll(a, -(a.shape[ax] // 2), axis=ax)
        return a

    fr_s, fi_s = fftshift_bhw(fr), fftshift_bhw(fi)
    cr = fr_s * pr[None] - fi_s * pi[None]
    ci = fr_s * pi[None] + fi_s * pr[None]
    cr, ci = ifftshift_bhw(cr), ifftshift_bhw(ci)
    s = jnp.fft.ifftn(cr + 1j * ci, axes=(0, 1, 2), norm="ortho")
    se = jnp.sqrt(jnp.real(s) ** 2 + jnp.imag(s) ** 2)
    data = jnp.mean(jnp.abs(se - jnp.sqrt(y[..., 0]))) / 2.0

    b = x.shape[0]
    h = x.shape[1]
    w = x.shape[2]
    h_x = x.shape[2]                       # mirrors the PyTorch TV exactly
    w_x = x.shape[3]                       # (= channel dim 2, causing a broadcast)
    count_h = (h - 1) * w * 2
    count_w = h * (w - 1) * 2
    h_tv = jnp.sum((x[:, 1:, :, :] - x[:, : h_x - 1, :, :]) ** 2)
    w_tv = jnp.sum((x[:, :, 1:, :] - x[:, :, : w_x - 1, :]) ** 2)
    tv = 0.01 * 2.0 * (h_tv / count_h + w_tv / count_w) / b
    return data + mylambda * tv


if __name__ == "__main__":
    B, H, W = 2, 16, 16   # small shapes; H == W == image_size for the propagator
    Z = 3.0
    MYLAMBDA = 0.05

    key = jax.random.PRNGKey(0)
    kx, ky = jax.random.split(key, 2)
    x = jax.random.normal(kx, (B, 2, 1, H, W), dtype=jnp.float32)
    # hologram intensity: channel 0 must be non-negative (it is sqrt-ed in the loss)
    y = jnp.abs(jax.random.normal(ky, (B, 2, 1, H, W), dtype=jnp.float32)) + 0.1
    mask = jnp.ones((B, 1, 1, H, W), dtype=jnp.float32)

    loss_mod = RECLossPallas(z=Z, image_size=H)
    loss = jax.block_until_ready(loss_mod(x, y, mask, mylambda=MYLAMBDA))

    ref = jax.block_until_ready(
        reference_loss(x, y, mask, loss_mod.prop_r, loss_mod.prop_i, MYLAMBDA))
    assert jnp.allclose(loss, ref, rtol=1e-4, atol=1e-5), (loss, ref)

    print("KERNEL_OK")
</pallas_src>

<mosaic_0001>
module attributes {stable_mosaic.version = 11 : i64} {
  func.func @_prop_mult_kernel(%arg0: i32, %arg1: i32, %arg2: memref<1x16x16xf32, #tpu.memory_space<vmem>>, %arg3: memref<1x16x16xf32, #tpu.memory_space<vmem>>, %arg4: memref<16x16xf32, #tpu.memory_space<vmem>>, %arg5: memref<16x16xf32, #tpu.memory_space<vmem>>, %arg6: memref<1x16x16xf32, #tpu.memory_space<vmem>>, %arg7: memref<1x16x16xf32, #tpu.memory_space<vmem>>) attributes {dimension_semantics = [#tpu.dimension_semantics<parallel>, #tpu.dimension_semantics<parallel>], iteration_bounds = array<i64: 1, 2>, scalar_prefetch = 0 : i64, scratch_operands = 0 : i64, tpu.core_type = #tpu.core_type<tc>, window_params = [{transform_indices = @transform_0, window_bounds = array<i64: 1, 16, 16>}, {transform_indices = @transform_1, window_bounds = array<i64: 1, 16, 16>}, {transform_indices = @transform_2, window_bounds = array<i64: 16, 16>}, {transform_indices = @transform_3, window_bounds = array<i64: 16, 16>}, {transform_indices = @transform_4, window_bounds = array<i64: 1, 16, 16>}, {transform_indices = @transform_5, window_bounds = array<i64: 1, 16, 16>}]} {
    %c0 = arith.constant 0 : index
    %c0_0 = arith.constant 0 : index
    %c0_1 = arith.constant 0 : index
    %0 = vector.load %arg2[%c0, %c0_0, %c0_1] : memref<1x16x16xf32, #tpu.memory_space<vmem>>, vector<1x16x16xf32>
    %c0_2 = arith.constant 0 : index
    %c0_3 = arith.constant 0 : index
    %c0_4 = arith.constant 0 : index
    %1 = vector.load %arg3[%c0_2, %c0_3, %c0_4] : memref<1x16x16xf32, #tpu.memory_space<vmem>>, vector<1x16x16xf32>
    %c0_5 = arith.constant 0 : index
    %c0_6 = arith.constant 0 : index
    %2 = vector.load %arg4[%c0_5, %c0_6] : memref<16x16xf32, #tpu.memory_space<vmem>>, vector<16x16xf32>
    %c0_7 = arith.constant 0 : index
    %c0_8 = arith.constant 0 : index
    %3 = vector.load %arg5[%c0_7, %c0_8] : memref<16x16xf32, #tpu.memory_space<vmem>>, vector<16x16xf32>
    %4 = vector.shape_cast %2 : vector<16x16xf32> to vector<1x16x16xf32>
    %5 = arith.mulf %0, %4 : vector<1x16x16xf32>
    %6 = vector.shape_cast %3 : vector<16x16xf32> to vector<1x16x16xf32>
    %7 = arith.mulf %1, %6 : vector<1x16x16xf32>
    %8 = arith.subf %5, %7 : vector<1x16x16xf32>
    %c0_9 = arith.constant 0 : index
    %c0_10 = arith.constant 0 : index
    %c0_11 = arith.constant 0 : index
    %9 = vector.load %arg6[%c0_9, %c0_10, %c0_11] : memref<1x16x16xf32, #tpu.memory_space<vmem>>, vector<1x16x16xf32>
    tpu.vector_store %arg6[%c0_9, %c0_10, %c0_11], %8 {strides = array<i32>} : memref<1x16x16xf32, #tpu.memory_space<vmem>>, vector<1x16x16xf32>,
    %10 = vector.shape_cast %3 : vector<16x16xf32> to vector<1x16x16xf32>
    %11 = arith.mulf %0, %10 : vector<1x16x16xf32>
    %12 = vector.shape_cast %2 : vector<16x16xf32> to vector<1x16x16xf32>
    %13 = arith.mulf %1, %12 : vector<1x16x16xf32>
    %14 = arith.addf %11, %13 : vector<1x16x16xf32>
    %c0_12 = arith.constant 0 : index
    %c0_13 = arith.constant 0 : index
    %c0_14 = arith.constant 0 : index
    %15 = vector.load %arg7[%c0_12, %c0_13, %c0_14] : memref<1x16x16xf32, #tpu.memory_space<vmem>>, vector<1x16x16xf32>
    tpu.vector_store %arg7[%c0_12, %c0_13, %c0_14], %14 {strides = array<i32>} : memref<1x16x16xf32, #tpu.memory_space<vmem>>, vector<1x16x16xf32>,
    return
  }
  func.func @transform_0(%arg0: i32, %arg1: i32) -> (i32, i32, i32) {
    %c0_i32 = arith.constant 0 : i32
    %c0_i32_0 = arith.constant 0 : i32
    return %arg1, %arg0, %c0_i32 : i32, i32, i32
  }
  func.func @transform_1(%arg0: i32, %arg1: i32) -> (i32, i32, i32) {
    %c0_i32 = arith.constant 0 : i32
    %c0_i32_0 = arith.constant 0 : i32
    return %arg1, %arg0, %c0_i32 : i32, i32, i32
  }
  func.func @transform_2(%arg0: i32, %arg1: i32) -> (i32, i32) {
    %c0_i32 = arith.constant 0 : i32
    %c0_i32_0 = arith.constant 0 : i32
    return %arg0, %c0_i32 : i32, i32
  }
  func.func @transform_3(%arg0: i32, %arg1: i32) -> (i32, i32) {
    %c0_i32 = arith.constant 0 : i32
    %c0_i32_0 = arith.constant 0 : i32
    return %arg0, %c0_i32 : i32, i32
  }
  func.func @transform_4(%arg0: i32, %arg1: i32) -> (i32, i32, i32) {
    %c0_i32 = arith.constant 0 : i32
    %c0_i32_0 = arith.constant 0 : i32
    return %arg1, %arg0, %c0_i32 : i32, i32, i32
  }
  func.func @transform_5(%arg0: i32, %arg1: i32) -> (i32, i32, i32) {
    %c0_i32 = arith.constant 0 : i32
    %c0_i32_0 = arith.constant 0 : i32
    return %arg1, %arg0, %c0_i32 : i32, i32, i32
  }
}

module attributes {stable_mosaic.version = 11 : i64} {
  func.func @_loss_partials_kernel(%arg0: i32, %arg1: i32, %arg2: memref<1x16x16xf32, #tpu.memory_space<vmem>>, %arg3: memref<1x16x16xf32, #tpu.memory_space<vmem>>, %arg4: memref<1x16x16xf32, #tpu.memory_space<vmem>>, %arg5: memref<1x16x16xf32, #tpu.memory_space<vmem>>, %arg6: memref<1x16x16xf32, #tpu.memory_space<vmem>>, %arg7: memref<1x1x8x128xf32, #tpu.memory_space<vmem>>) attributes {dimension_semantics = [#tpu.dimension_semantics<parallel>, #tpu.dimension_semantics<parallel>], iteration_bounds = array<i64: 2, 1>, scalar_prefetch = 0 : i64, scratch_operands = 0 : i64, tpu.core_type = #tpu.core_type<tc>, window_params = [{transform_indices = @transform_0, window_bounds = array<i64: 1, 16, 16>}, {transform_indices = @transform_1, window_bounds = array<i64: 1, 16, 16>}, {transform_indices = @transform_2, window_bounds = array<i64: 1, 16, 16>}, {transform_indices = @transform_3, window_bounds = array<i64: 1, 16, 16>}, {transform_indices = @transform_4, window_bounds = array<i64: 1, 16, 16>}, {transform_indices = @transform_5, window_bounds = array<i64: 1, 1, 8, 128>}]} {
    %c0 = arith.constant 0 : index
    %c0_0 = arith.constant 0 : index
    %c0_1 = arith.constant 0 : index
    %0 = vector.load %arg2[%c0, %c0_0, %c0_1] : memref<1x16x16xf32, #tpu.memory_space<vmem>>, vector<1x16x16xf32>
    %1 = vector.shape_cast %0 : vector<1x16x16xf32> to vector<16x16xf32>
    %c0_2 = arith.constant 0 : index
    %c0_3 = arith.constant 0 : index
    %c0_4 = arith.constant 0 : index
    %2 = vector.load %arg3[%c0_2, %c0_3, %c0_4] : memref<1x16x16xf32, #tpu.memory_space<vmem>>, vector<1x16x16xf32>
    %3 = vector.shape_cast %2 : vector<1x16x16xf32> to vector<16x16xf32>
    %c0_5 = arith.constant 0 : index
    %c0_6 = arith.constant 0 : index
    %c0_7 = arith.constant 0 : index
    %4 = vector.load %arg4[%c0_5, %c0_6, %c0_7] : memref<1x16x16xf32, #tpu.memory_space<vmem>>, vector<1x16x16xf32>
    %5 = vector.shape_cast %4 : vector<1x16x16xf32> to vector<16x16xf32>
    %6 = arith.mulf %1, %1 : vector<16x16xf32>
    %7 = arith.mulf %3, %3 : vector<16x16xf32>
    %8 = arith.addf %6, %7 : vector<16x16xf32>
    %9 = math.sqrt %8 : vector<16x16xf32>
    %10 = math.sqrt %5 : vector<16x16xf32>
    %11 = arith.subf %9, %10 : vector<16x16xf32>
    %12 = math.absf %11 : vector<16x16xf32>
    %13 = vector.shape_cast %12 : vector<16x16xf32> to vector<1x16x16xf32>
    %cst = arith.constant dense<0.000000e+00> : vector<1xf32>
    %14 = vector.multi_reduction <add>, %13, %cst [1, 2] : vector<1x16x16xf32> to vector<1xf32>
    %15 = vector.shape_cast %14 : vector<1xf32> to vector<1x1x1xf32>
    %16 = vector.extract %15[0, 0, 0] : f32 from vector<1x1x1xf32>
    %c0_8 = arith.constant 0 : index
    %c0_9 = arith.constant 0 : index
    %c0_10 = arith.constant 0 : index
    %17 = vector.load %arg5[%c0_8, %c0_9, %c0_10] : memref<1x16x16xf32, #tpu.memory_space<vmem>>, vector<1x16x16xf32>
    %18 = vector.shape_cast %17 : vector<1x16x16xf32> to vector<16x16xf32>
    %c0_11 = arith.constant 0 : index
    %c0_12 = arith.constant 0 : index
    %c0_13 = arith.constant 0 : index
    %19 = vector.load %arg6[%c0_11, %c0_12, %c0_13] : memref<1x16x16xf32, #tpu.memory_space<vmem>>, vector<1x16x16xf32>
    %20 = vector.shape_cast %19 : vector<1x16x16xf32> to vector<16x16xf32>
    %c1_i32 = arith.constant 1 : i32
    %21 = tpu.dynamic_rotate %18 by %c1_i32 dim 0 : vector<16x16xf32>, i32 -> vector<16x16xf32>
    %22 = arith.subf %21, %18 : vector<16x16xf32>
    %23 = vector.extract_strided_slice %18 {offsets = [0, 0], sizes = [1, 16], strides = [1, 1]} : vector<16x16xf32> to vector<1x16xf32>
    %24 = vector.extract_strided_slice %18 {offsets = [15, 0], sizes = [1, 16], strides = [1, 1]} : vector<16x16xf32> to vector<1x16xf32>
    %25 = arith.subf %23, %24 : vector<1x16xf32>
    %26 = arith.mulf %22, %22 : vector<16x16xf32>
    %27 = vector.shape_cast %26 : vector<16x16xf32> to vector<1x16x16xf32>
    %cst_14 = arith.constant dense<0.000000e+00> : vector<1xf32>
    %28 = vector.multi_reduction <add>, %27, %cst_14 [1, 2] : vector<1x16x16xf32> to vector<1xf32>
    %29 = vector.shape_cast %28 : vector<1xf32> to vector<1x1x1xf32>
    %30 = vector.extract %29[0, 0, 0] : f32 from vector<1x1x1xf32>
    %31 = arith.mulf %25, %25 : vector<1x16xf32>
    %32 = vector.shape_cast %31 : vector<1x16xf32> to vector<1x1x16xf32>
    %cst_15 = arith.constant dense<0.000000e+00> : vector<1xf32>
    %33 = vector.multi_reduction <add>, %32, %cst_15 [1, 2] : vector<1x1x16xf32> to vector<1xf32>
    %34 = vector.shape_cast %33 : vector<1xf32> to vector<1x1x1xf32>
    %35 = vector.extract %34[0, 0, 0] : f32 from vector<1x1x1xf32>
    %36 = arith.subf %30, %35 : f32
    %c1_i32_16 = arith.constant 1 : i32
    %37 = tpu.dynamic_rotate %20 by %c1_i32_16 dim 0 : vector<16x16xf32>, i32 -> vector<16x16xf32>
    %38 = arith.subf %37, %20 : vector<16x16xf32>
    %39 = vector.extract_strided_slice %20 {offsets = [0, 0], sizes = [1, 16], strides = [1, 1]} : vector<16x16xf32> to vector<1x16xf32>
    %40 = vector.extract_strided_slice %20 {offsets = [15, 0], sizes = [1, 16], strides = [1, 1]} : vector<16x16xf32> to vector<1x16xf32>
    %41 = arith.subf %39, %40 : vector<1x16xf32>
    %42 = arith.mulf %38, %38 : vector<16x16xf32>
    %43 = vector.shape_cast %42 : vector<16x16xf32> to vector<1x16x16xf32>
    %cst_17 = arith.constant dense<0.000000e+00> : vector<1xf32>
    %44 = vector.multi_reduction <add>, %43, %cst_17 [1, 2] : vector<1x16x16xf32> to vector<1xf32>
    %45 = vector.shape_cast %44 : vector<1xf32> to vector<1x1x1xf32>
    %46 = vector.extract %45[0, 0, 0] : f32 from vector<1x1x1xf32>
    %47 = arith.mulf %41, %41 : vector<1x16xf32>
    %48 = vector.shape_cast %47 : vector<1x16xf32> to vector<1x1x16xf32>
    %cst_18 = arith.constant dense<0.000000e+00> : vector<1xf32>
    %49 = vector.multi_reduction <add>, %48, %cst_18 [1, 2] : vector<1x1x16xf32> to vector<1xf32>
    %50 = vector.shape_cast %49 : vector<1xf32> to vector<1x1x1xf32>
    %51 = vector.extract %50[0, 0, 0] : f32 from vector<1x1x1xf32>
    %52 = arith.subf %46, %51 : f32
    %53 = arith.addf %36, %52 : f32
    %54 = vector.extract_strided_slice %18 {offsets = [0, 0], sizes = [16, 1], strides = [1, 1]} : vector<16x16xf32> to vector<16x1xf32>
    %55 = vector.broadcast %54 : vector<16x1xf32> to vector<16x16xf32>
    %56 = arith.subf %18, %55 : vector<16x16xf32>
    %57 = arith.mulf %56, %56 : vector<16x16xf32>
    %58 = vector.shape_cast %57 : vector<16x16xf32> to vector<1x16x16xf32>
    %cst_19 = arith.constant dense<0.000000e+00> : vector<1xf32>
    %59 = vector.multi_reduction <add>, %58, %cst_19 [1, 2] : vector<1x16x16xf32> to vector<1xf32>
    %60 = vector.shape_cast %59 : vector<1xf32> to vector<1x1x1xf32>
    %61 = vector.extract %60[0, 0, 0] : f32 from vector<1x1x1xf32>
    %62 = vector.extract_strided_slice %20 {offsets = [0, 0], sizes = [16, 1], strides = [1, 1]} : vector<16x16xf32> to vector<16x1xf32>
    %63 = vector.broadcast %62 : vector<16x1xf32> to vector<16x16xf32>
    %64 = arith.subf %20, %63 : vector<16x16xf32>
    %65 = arith.mulf %64, %64 : vector<16x16xf32>
    %66 = vector.shape_cast %65 : vector<16x16xf32> to vector<1x16x16xf32>
    %cst_20 = arith.constant dense<0.000000e+00> : vector<1xf32>
    %67 = vector.multi_reduction <add>, %66, %cst_20 [1, 2] : vector<1x16x16xf32> to vector<1xf32>
    %68 = vector.shape_cast %67 : vector<1xf32> to vector<1x1x1xf32>
    %69 = vector.extract %68[0, 0, 0] : f32 from vector<1x1x1xf32>
    %70 = arith.addf %61, %69 : f32
    %71 = tpu.iota {dimensions = array<i32: 0>} : vector<8x128xi32>
    %c0_i32 = arith.constant 0 : i32
    %72 = vector.broadcast %c0_i32 : i32 to vector<8x128xi32>
    %73 = arith.cmpi eq, %71, %72 : vector<8x128xi32>
    %c1_i32_21 = arith.constant 1 : i32
    %74 = vector.broadcast %c1_i32_21 : i32 to vector<8x128xi32>
    %75 = arith.cmpi eq, %71, %74 : vector<8x128xi32>
    %c2_i32 = arith.constant 2 : i32
    %76 = vector.broadcast %c2_i32 : i32 to vector<8x128xi32>
    %77 = arith.cmpi eq, %71, %76 : vector<8x128xi32>
    %cst_22 = arith.constant 0.000000e+00 : f32
    %78 = vector.broadcast %70 : f32 to vector<8x128xf32>
    %79 = vector.broadcast %cst_22 : f32 to vector<8x128xf32>
    %80 = arith.select %77, %78, %79 : vector<8x128xi1>, vector<8x128xf32>
    %81 = vector.broadcast %53 : f32 to vector<8x128xf32>
    %82 = arith.select %75, %81, %80 : vector<8x128xi1>, vector<8x128xf32>
    %83 = vector.broadcast %16 : f32 to vector<8x128xf32>
    %84 = arith.select %73, %83, %82 : vector<8x128xi1>, vector<8x128xf32>
    %85 = vector.shape_cast %84 : vector<8x128xf32> to vector<1x1x8x128xf32>
    %c0_23 = arith.constant 0 : index
    %c0_24 = arith.constant 0 : index
    %c0_25 = arith.constant 0 : index
    %c0_26 = arith.constant 0 : index
    %86 = vector.load %arg7[%c0_23, %c0_24, %c0_25, %c0_26] : memref<1x1x8x128xf32, #tpu.memory_space<vmem>>, vector<1x1x8x128xf32>
    tpu.vector_store %arg7[%c0_23, %c0_24, %c0_25, %c0_26], %85 {strides = array<i32>} : memref<1x1x8x128xf32, #tpu.memory_space<vmem>>, vector<1x1x8x128xf32>,
    return
  }
  func.func @transform_0(%arg0: i32, %arg1: i32) -> (i32, i32, i32) {
    %c0_i32 = arith.constant 0 : i32
    %c0_i32_0 = arith.constant 0 : i32
    return %arg0, %arg1, %c0_i32 : i32, i32, i32
  }
  func.func @transform_1(%arg0: i32, %arg1: i32) -> (i32, i32, i32) {
    %c0_i32 = arith.constant 0 : i32
    %c0_i32_0 = arith.constant 0 : i32
    return %arg0, %arg1, %c0_i32 : i32, i32, i32
  }
  func.func @transform_2(%arg0: i32, %arg1: i32) -> (i32, i32, i32) {
    %c0_i32 = arith.constant 0 : i32
    %c0_i32_0 = arith.constant 0 : i32
    return %arg0, %arg1, %c0_i32 : i32, i32, i32
  }
  func.func @transform_3(%arg0: i32, %arg1: i32) -> (i32, i32, i32) {
    %c0_i32 = arith.constant 0 : i32
    %c0_i32_0 = arith.constant 0 : i32
    return %arg0, %arg1, %c0_i32 : i32, i32, i32
  }
  func.func @transform_4(%arg0: i32, %arg1: i32) -> (i32, i32, i32) {
    %c0_i32 = arith.constant 0 : i32
    %c0_i32_0 = arith.constant 0 : i32
    return %arg0, %arg1, %c0_i32 : i32, i32, i32
  }
  func.func @transform_5(%arg0: i32, %arg1: i32) -> (i32, i32, i32, i32) {
    %c0_i32 = arith.constant 0 : i32
    %c0_i32_0 = arith.constant 0 : i32
    %c0_i32_1 = arith.constant 0 : i32
    return %arg0, %arg1, %c0_i32, %c0_i32_0 : i32, i32, i32, i32
  }
}

</mosaic_0001>

<llo_original>
// kernel: _rec_loss_forward.2
$region0: #{_rec_loss_forward.2}
  #allocation0 [shape = 'u32[]', space=smem, size = 0x4, offset = 0x4, fixed_abs, tag = 'smem constant byte address 0x4 - core index']
  #allocation1 [shape = 'u32[144,128]{1,0:T(1,128)}', space=vmem, size = 0x12000, scoped, tag = 'internal scratch']
  %s0 = inlined_call_operand.vmem [shape: f32[2,16,16], index: 0, kind: input, shape index: {}]
  %s1 = inlined_call_operand.vmem [shape: f32[2,16,16], index: 1, kind: input, shape index: {}]
  %s2 = inlined_call_operand.vmem [shape: f32[16,16], index: 2, kind: input, shape index: {}]
  %s3 = inlined_call_operand.vmem [shape: f32[16,16], index: 3, kind: input, shape index: {}]
  %s4 = inlined_call_operand.vmem [shape: f32[2,16,16], index: 4, kind: output, shape index: {0}]
  %s5 = inlined_call_operand.vmem [shape: f32[2,16,16], index: 5, kind: output, shape index: {1}]
  %6 = xla_tuple %s4, %s5
  %s7 = sld [smem:[#allocation0]]
  $region57: #{_rec_loss_forward.2} parent=0
    _
  %s9 = ssub.s32 1, %s7
  %s10 = scalar_select 0, %s9, %s7
  loop: start=0, step=1, limit=4
  $region2: #{_rec_loss_forward.2} parent=0 // loop_pre_header
    _
  $region3: #{_rec_loss_forward.2} parent=0 // loop_header
    %s12 = sphi 0, %s16
    %p13 = scmp.ge.s32.totalorder %s12, 4
    %s19 = sphi 0, %s31
    %s20 = sphi 0, %s27
    %s21 = sphi 0, %s19
    %s22 = sphi 0, %s20
    %s23 = sphi 0, %s21
    %s24 = sphi 0, %s22
    %s36 = sphi 0, %s38
    %s39 = sphi 0, %s36
    %s40 = sphi 0, %s39
    %s56 = sphi 0, %s40
    %s64 = sphi 0, %s66
    %s67 = sphi 0, %s64
    %s68 = sphi 0, %s67
    %s84 = sphi 0, %s68
    %s90 = sphi 0, %s92
    %s93 = sphi 0, %s90
    %s94 = sphi 0, %s93
    %s110 = sphi 0, %s94
    %s116 = sphi 0, %s118
    %s119 = sphi 0, %s116
    %s120 = sphi 0, %s119
    %s136 = sphi 0, %s120
    %s144 = sphi 0, %s146
    %s147 = sphi 0, %s144
    %s148 = sphi 0, %s147
    %s164 = sphi 0, %s148
    %s172 = sphi 0, %s174
    %s175 = sphi 0, %s172
    %s176 = sphi 0, %s175
    %s192 = sphi 0, %s176
  $region4: #{_rec_loss_forward.2} parent=0 // loop_header_branch
    %15 = sbr.rel (%p13) target = $region8
  $region5: #{_rec_loss_forward.2} parent=0 // loop_body
    %s17 = ssub.s32 %s12, 1
    %s18 = ssub.s32 %s12, 2
    %s25 = sadd.s32 1, %s20
    %p26 = scmp.ge.s32.totalorder %s25, 2
    %s27 = scalar_select %p26, 0, %s25
    %s28 = sadd.s32 1, %s19
    %s29 = scalar_select %p26, %s28, %s19
    %p30 = scmp.ge.s32.totalorder %s29, 1
    %s31 = scalar_select %p30, 0, %s29
    %s32 = ssub.s32 %s20, %s27
    %s33 = ssub.s32 %s19, %s31
    %s34 = sor.u32 %s32, %s33
    %p35 = scmp.eq.s32.totalorder %s34, 0
    %s37 = sadd.s32 %s36, 1
    %s38 = scalar_select %p35, %s36, %s37
    %p41 = pneg %p35
    %p42 = scmp.eq.s32.totalorder %s12, 1
    %p43 = por %p41, %p42
    %p44 = scmp.ne.s32.totalorder %s36, %s39
    %p45 = scmp.eq.s32.totalorder %s12, 0
    %p46 = por %p44, %p45
    %p47 = scmp.ne.s32.totalorder %s36, %s39
    %p48 = scmp.eq.s32.totalorder %s17, 1
    %p49 = por %p47, %p48
    %p50 = scmp.ne.s32.totalorder %s39, %s40
    %p51 = scmp.eq.s32.totalorder %s17, 0
    %p52 = por %p50, %p51
    %p53 = scmp.ne.s32.totalorder %s39, %s40
    %p54 = scmp.eq.s32.totalorder %s18, 1
    %p55 = por %p53, %p54
    %p57 = scmp.ne.s32.totalorder %s40, %s56
    %p58 = scmp.eq.s32.totalorder %s18, 0
    %p59 = por %p57, %p58
    %s60 = ssub.s32 %s20, %s27
    %s61 = ssub.s32 %s19, %s31
    %s62 = sor.u32 %s60, %s61
    %p63 = scmp.eq.s32.totalorder %s62, 0
    %s65 = sadd.s32 %s64, 1
    %s66 = scalar_select %p63, %s64, %s65
    %p69 = pneg %p63
    %p70 = scmp.eq.s32.totalorder %s12, 1
    %p71 = por %p69, %p70
    %p72 = scmp.ne.s32.totalorder %s64, %s67
    %p73 = scmp.eq.s32.totalorder %s12, 0
    %p74 = por %p72, %p73
    %p75 = scmp.ne.s32.totalorder %s64, %s67
    %p76 = scmp.eq.s32.totalorder %s17, 1
    %p77 = por %p75, %p76
    %p78 = scmp.ne.s32.totalorder %s67, %s68
    %p79 = scmp.eq.s32.totalorder %s17, 0
    %p80 = por %p78, %p79
    %p81 = scmp.ne.s32.totalorder %s67, %s68
    %p82 = scmp.eq.s32.totalorder %s18, 1
    %p83 = por %p81, %p82
    %p85 = scmp.ne.s32.totalorder %s68, %s84
    %p86 = scmp.eq.s32.totalorder %s18, 0
    %p87 = por %p85, %p86
    %s88 = ssub.s32 %s19, %s31
    %p89 = scmp.eq.s32.totalorder %s88, 0
    %s91 = sadd.s32 %s90, 1
    %s92 = scalar_select %p89, %s90, %s91
    %p95 = pneg %p89
    %p96 = scmp.eq.s32.totalorder %s12, 1
    %p97 = por %p95, %p96
    %p98 = scmp.ne.s32.totalorder %s90, %s93
    %p99 = scmp.eq.s32.totalorder %s12, 0
    %p100 = por %p98, %p99
    %p101 = scmp.ne.s32.totalorder %s90, %s93
    %p102 = scmp.eq.s32.totalorder %s17, 1
    %p103 = por %p101, %p102
    %p104 = scmp.ne.s32.totalorder %s93, %s94
    %p105 = scmp.eq.s32.totalorder %s17, 0
    %p106 = por %p104, %p105
    %p107 = scmp.ne.s32.totalorder %s93, %s94
    %p108 = scmp.eq.s32.totalorder %s18, 1
    %p109 = por %p107, %p108
    %p111 = scmp.ne.s32.totalorder %s94, %s110
    %p112 = scmp.eq.s32.totalorder %s18, 0
    %p113 = por %p111, %p112
    %s114 = ssub.s32 %s19, %s31
    %p115 = scmp.eq.s32.totalorder %s114, 0
    %s117 = sadd.s32 %s116, 1
    %s118 = scalar_select %p115, %s116, %s117
    %p121 = pneg %p115
    %p122 = scmp.eq.s32.totalorder %s12, 1
    %p123 = por %p121, %p122
    %p124 = scmp.ne.s32.totalorder %s116, %s119
    %p125 = scmp.eq.s32.totalorder %s12, 0
    %p126 = por %p124, %p125
    %p127 = scmp.ne.s32.totalorder %s116, %s119
    %p128 = scmp.eq.s32.totalorder %s17, 1
    %p129 = por %p127, %p128
    %p130 = scmp.ne.s32.totalorder %s119, %s120
    %p131 = scmp.eq.s32.totalorder %s17, 0
    %p132 = por %p130, %p131
    %p133 = scmp.ne.s32.totalorder %s119, %s120
    %p134 = scmp.eq.s32.totalorder %s18, 1
    %p135 = por %p133, %p134
    %p137 = scmp.ne.s32.totalorder %s120, %s136
    %p138 = scmp.eq.s32.totalorder %s18, 0
    %p139 = por %p137, %p138
    %s140 = ssub.s32 %s20, %s27
    %s141 = ssub.s32 %s19, %s31
    %s142 = sor.u32 %s140, %s141
    %p143 = scmp.eq.s32.totalorder %s142, 0
    %s145 = sadd.s32 %s144, 1
    %s146 = scalar_select %p143, %s144, %s145
    %p149 = pneg %p143
    %p150 = scmp.eq.s32.totalorder %s12, 1
    %p151 = por %p149, %p150
    %p152 = scmp.ne.s32.totalorder %s144, %s147
    %p153 = scmp.eq.s32.totalorder %s12, 0
    %p154 = por %p152, %p153
    %p155 = scmp.ne.s32.totalorder %s144, %s147
    %p156 = scmp.eq.s32.totalorder %s17, 1
    %p157 = por %p155, %p156
    %p158 = scmp.ne.s32.totalorder %s147, %s148
    %p159 = scmp.eq.s32.totalorder %s17, 0
    %p160 = por %p158, %p159
    %p161 = scmp.ne.s32.totalorder %s147, %s148
    %p162 = scmp.eq.s32.totalorder %s18, 1
    %p163 = por %p161, %p162
    %p165 = scmp.ne.s32.totalorder %s148, %s164
    %p166 = scmp.eq.s32.totalorder %s18, 0
    %p167 = por %p165, %p166
    %s168 = ssub.s32 %s20, %s27
    %s169 = ssub.s32 %s19, %s31
    %s170 = sor.u32 %s168, %s169
    %p171 = scmp.eq.s32.totalorder %s170, 0
    %s173 = sadd.s32 %s172, 1
    %s174 = scalar_select %p171, %s172, %s173
    %p177 = pneg %p171
    %p178 = scmp.eq.s32.totalorder %s12, 1
    %p179 = por %p177, %p178
    %p180 = scmp.ne.s32.totalorder %s172, %s175
    %p181 = scmp.eq.s32.totalorder %s12, 0
    %p182 = por %p180, %p181
    %p183 = scmp.ne.s32.totalorder %s172, %s175
    %p184 = scmp.eq.s32.totalorder %s17, 1
    %p185 = por %p183, %p184
    %p186 = scmp.ne.s32.totalorder %s175, %s176
    %p187 = scmp.eq.s32.totalorder %s17, 0
    %p188 = por %p186, %p187
    %p189 = scmp.ne.s32.totalorder %s175, %s176
    %p190 = scmp.eq.s32.totalorder %s18, 1
    %p191 = por %p189, %p190
    %p193 = scmp.ne.s32.totalorder %s176, %s192
    %p194 = scmp.eq.s32.totalorder %s18, 0
    %p195 = por %p193, %p194
    %p196 = scmp.le.s32.totalorder 1, %s12
    %p197 = scmp.lt.s32.totalorder %s12, 3
    %p198 = pnand %p196, %p197
    %p199 = pneg %p198
    // Predicated region
    $region9: #{_rec_loss_forward.2} parent=5 // pred_check
      _
    $region10: #{_rec_loss_forward.2} parent=5 // pred_check_branch
      %201 = sbr.rel (%p198) target = $region12
    $region11: #{_rec_loss_forward.2} parent=5 // pred_region
      %s202 = ssub.s32 %s12, 1
      // Predicated region
      $region13: #{_rec_loss_forward.2} parent=11 // pred_check
        %p203 = pneg %p106
      $region14: #{_rec_loss_forward.2} parent=11 // pred_check_branch
        %205 = sbr.rel (%p203) target = $region16
      $region15: #{_rec_loss_forward.2} parent=11 // pred_region
        %s206 = smul.u32 2, %s21
        %p207 = scmp.lt.s32.totalorder %s206, 1
        %s208 = scalar_select %p207, %s206, 1
        %s209 = smul.addr %s208, 8
        %s210 = scalar_lea.vmem %s2, %s209
        %s211 = smul.u32 2, %s21
      $region16: #{_rec_loss_forward.2} parent=11 // pred_fallthru
        _
      // Predicated region
      $region17: #{_rec_loss_forward.2} parent=11 // pred_check
        %p212 = pneg %p132
      $region18: #{_rec_loss_forward.2} parent=11 // pred_check_branch
        %214 = sbr.rel (%p212) target = $region20
      $region19: #{_rec_loss_forward.2} parent=11 // pred_region
        %s215 = smul.u32 2, %s21
        %p216 = scmp.lt.s32.totalorder %s215, 1
        %s217 = scalar_select %p216, %s215, 1
        %s218 = smul.addr %s217, 8
        %s219 = scalar_lea.vmem %s3, %s218
        %s220 = smul.u32 2, %s21
      $region20: #{_rec_loss_forward.2} parent=11 // pred_fallthru
        _
    $region12: #{_rec_loss_forward.2} parent=5 // pred_fallthru
      _
    %p221 = scmp.lt.s32.totalorder %s12, 2
    // Predicated region
    $region21: #{_rec_loss_forward.2} parent=5 // pred_check
      %p222 = pneg %p221
    $region22: #{_rec_loss_forward.2} parent=5 // pred_check_branch
      %224 = sbr.rel (%p222) target = $region24
    $region23: #{_rec_loss_forward.2} parent=5 // pred_region
      // Predicated region
      $region25: #{_rec_loss_forward.2} parent=23 // pred_check
        %p225 = pneg %p46
      $region26: #{_rec_loss_forward.2} parent=23 // pred_check_branch
        %227 = sbr.rel (%p225) target = $region28
      $region27: #{_rec_loss_forward.2} parent=23 // pred_region
        %s228 = smul.u32 2, %s19
        %p229 = scmp.lt.s32.totalorder %s20, 1
        %s230 = scalar_select %p229, %s20, 1
        %p231 = scmp.lt.s32.totalorder %s228, 1
        %s232 = scalar_select %p231, %s228, 1
        %s233 = smul.addr %s230, 2
        %s234 = sadd.s32 %s232, %s233
        %s235 = smul.addr %s234, 8
        %s236 = scalar_lea.vmem %s0, %s235
        %s237 = smul.u32 2, %s19
      $region28: #{_rec_loss_forward.2} parent=23 // pred_fallthru
        _
      // Predicated region
      $region29: #{_rec_loss_forward.2} parent=23 // pred_check
        %p238 = pneg %p74
      $region30: #{_rec_loss_forward.2} parent=23 // pred_check_branch
        %240 = sbr.rel (%p238) target = $region32
      $region31: #{_rec_loss_forward.2} parent=23 // pred_region
        %s241 = smul.u32 2, %s19
        %p242 = scmp.lt.s32.totalorder %s20, 1
        %s243 = scalar_select %p242, %s20, 1
        %p244 = scmp.lt.s32.totalorder %s241, 1
        %s245 = scalar_select %p244, %s241, 1
        %s246 = smul.addr %s243, 2
        %s247 = sadd.s32 %s245, %s246
        %s248 = smul.addr %s247, 8
        %s249 = scalar_lea.vmem %s1, %s248
        %s250 = smul.u32 2, %s19
      $region32: #{_rec_loss_forward.2} parent=23 // pred_fallthru
        _
    $region24: #{_rec_loss_forward.2} parent=5 // pred_fallthru
      _
    %p251 = scmp.le.s32.totalorder 1, %s12
    %p252 = scmp.lt.s32.totalorder %s12, 3
    %p253 = pnand %p251, %p252
    %p254 = pneg %p253
    // Predicated region
    $region33: #{_rec_loss_forward.2} parent=5 // pred_check
      _
    $region34: #{_rec_loss_forward.2} parent=5 // pred_check_branch
      %256 = sbr.rel (%p253) target = $region36
    $region35: #{_rec_loss_forward.2} parent=5 // pred_region
      %s257 = ssub.s32 %s12, 1
      %s258 = smul.u32 2, %s21
      %p259 = scmp.lt.s32.totalorder %s22, 1
      %s260 = scalar_select %p259, %s22, 1
      %p261 = scmp.lt.s32.totalorder %s258, 1
      %s262 = scalar_select %p261, %s258, 1
      %s263 = smul.addr %s260, 2
      %s264 = sadd.s32 %s262, %s263
      %s265 = smul.addr %s264, 8
      %s266 = scalar_lea.vmem %s0, %s265
      %p267 = pneg %p52
      %p268 = pneg %p49
      %s269 = smul.u32 2, %s21
      %p270 = scmp.lt.s32.totalorder %s22, 1
      %s271 = scalar_select %p270, %s22, 1
      %p272 = scmp.lt.s32.totalorder %s269, 1
      %s273 = scalar_select %p272, %s269, 1
      %s274 = smul.addr %s271, 2
      %s275 = sadd.s32 %s273, %s274
      %s276 = smul.addr %s275, 8
      %s277 = scalar_lea.vmem %s1, %s276
      %p278 = pneg %p80
      %p279 = pneg %p77
      %s280 = smul.u32 2, %s21
      %p281 = scmp.lt.s32.totalorder %s280, 1
      %s282 = scalar_select %p281, %s280, 1
      %s283 = smul.addr %s282, 8
      %s284 = scalar_lea.vmem %s2, %s283
      %p285 = pneg %p106
      %p286 = pneg %p103
      %s287 = smul.u32 2, %s21
      %p288 = scmp.lt.s32.totalorder %s287, 1
      %s289 = scalar_select %p288, %s287, 1
      %s290 = smul.addr %s289, 8
      %s291 = scalar_lea.vmem %s3, %s290
      %p292 = pneg %p132
      %p293 = pneg %p129
      %p294 = pneg %p160
      %p295 = pneg %p157
      %s296 = smul.u32 2, %s21
      %p297 = scmp.lt.s32.totalorder %s22, 1
      %s298 = scalar_select %p297, %s22, 1
      %p299 = scmp.lt.s32.totalorder %s296, 1
      %s300 = scalar_select %p299, %s296, 1
      %s301 = smul.addr %s298, 2
      %s302 = sadd.s32 %s300, %s301
      %s303 = smul.addr %s302, 8
      %s304 = scalar_lea.vmem %s4, %s303
      %p305 = pneg %p188
      %p306 = pneg %p185
      %s307 = smul.u32 2, %s21
      %p308 = scmp.lt.s32.totalorder %s22, 1
      %s309 = scalar_select %p308, %s22, 1
      %p310 = scmp.lt.s32.totalorder %s307, 1
      %s311 = scalar_select %p310, %s307, 1
      %s312 = smul.addr %s309, 2
      %s313 = sadd.s32 %s311, %s312
      %s314 = smul.addr %s313, 8
      %s315 = scalar_lea.vmem %s5, %s314
      %s316 = smul.u32 2, %s21
      %p317 = scmp.lt.s32.totalorder %s22, 1
      %s318 = scalar_select %p317, %s22, 1
      %p319 = scmp.lt.s32.totalorder %s316, 1
      %s320 = scalar_select %p319, %s316, 1
      %s321 = smul.addr %s318, 2
      %s322 = sadd.s32 %s320, %s321
      %s323 = smul.addr %s322, 8
      %s324 = scalar_lea.vmem %s0, %s323
      %s325 = smul.u32 2, %s21
      %s326 = smul.u32 2, %s21
      %p327 = scmp.lt.s32.totalorder %s22, 1
      %s328 = scalar_select %p327, %s22, 1
      %p329 = scmp.lt.s32.totalorder %s326, 1
      %s330 = scalar_select %p329, %s326, 1
      %s331 = smul.addr %s328, 2
      %s332 = sadd.s32 %s330, %s331
      %s333 = smul.addr %s332, 8
      %s334 = scalar_lea.vmem %s1, %s333
      %s335 = smul.u32 2, %s21
      %s336 = smul.u32 2, %s21
      %p337 = scmp.lt.s32.totalorder %s336, 1
      %s338 = scalar_select %p337, %s336, 1
      %s339 = smul.addr %s338, 8
      %s340 = scalar_lea.vmem %s2, %s339
      %s341 = smul.u32 2, %s21
      %s342 = smul.u32 2, %s21
      %p343 = scmp.lt.s32.totalorder %s342, 1
      %s344 = scalar_select %p343, %s342, 1
      %s345 = smul.addr %s344, 8
      %s346 = scalar_lea.vmem %s3, %s345
      %s347 = smul.u32 2, %s21
      %s348 = smul.u32 2, %s21
      %p349 = scmp.lt.s32.totalorder %s22, 1
      %s350 = scalar_select %p349, %s22, 1
      %p351 = scmp.lt.s32.totalorder %s348, 1
      %s352 = scalar_select %p351, %s348, 1
      %s353 = smul.addr %s350, 2
      %s354 = sadd.s32 %s352, %s353
      %s355 = smul.addr %s354, 8
      %s356 = scalar_lea.vmem %s4, %s355
      %s357 = smul.u32 2, %s21
      %s358 = smul.u32 2, %s21
      %p359 = scmp.lt.s32.totalorder %s22, 1
      %s360 = scalar_select %p359, %s22, 1
      %p361 = scmp.lt.s32.totalorder %s358, 1
      %s362 = scalar_select %p361, %s358, 1
      %s363 = smul.addr %s360, 2
      %s364 = sadd.s32 %s362, %s363
      %s365 = smul.addr %s364, 8
      %s366 = scalar_lea.vmem %s5, %s365
      %s367 = smul.u32 2, %s21
      %v368 = vld [vmem:[%s324] sm:$0xff]
      %v369 = vld [vmem:[%s324 + $0x8] sm:$0xff]
      %v370 = vld [vmem:[%s334] sm:$0xff]
      %v371 = vld [vmem:[%s334 + $0x8] sm:$0xff]
      %v372 = vld [vmem:[%s340] sm:$0xff]
      %v373 = vld [vmem:[%s340 + $0x8] sm:$0xff]
      %v374 = vld [vmem:[%s346] sm:$0xff]
      %v375 = vld [vmem:[%s346 + $0x8] sm:$0xff]
      %v376 = vmul.f32 %v368, %v372
      %v377 = vmul.f32 %v369, %v373
      %v378 = vmul.f32 %v370, %v374
      %v379 = vmul.f32 %v371, %v375
      %v380 = vsub.f32 %v376, %v378
      %v381 = vsub.f32 %v377, %v379
      %vm382 = vcmask 130048
      %383 = vst.msk [vmem:[%s356] sm:$0xff] %vm382, %v380
      %384 = vst.msk [vmem:[%s356 + $0x8] sm:$0xff] %vm382, %v381
      %v385 = vmul.f32 %v368, %v374
      %v386 = vmul.f32 %v369, %v375
      %v387 = vmul.f32 %v370, %v372
      %v388 = vmul.f32 %v371, %v373
      %v389 = vadd.f32 %v385, %v387
      %v390 = vadd.f32 %v386, %v388
      %391 = vst.msk [vmem:[%s366] sm:$0xff] %vm382, %v389
      %392 = vst.msk [vmem:[%s366 + $0x8] sm:$0xff] %vm382, %v390
      %s393 = smul.u32 2, %s21
      %p394 = scmp.lt.s32.totalorder %s22, 1
      %s395 = scalar_select %p394, %s22, 1
      %p396 = scmp.lt.s32.totalorder %s393, 1
      %s397 = scalar_select %p396, %s393, 1
      %s398 = smul.addr %s395, 2
      %s399 = sadd.s32 %s397, %s398
      %s400 = smul.addr %s399, 8
      %s401 = scalar_lea.vmem %s4, %s400
      %s402 = smul.u32 2, %s21
      %p403 = scmp.lt.s32.totalorder %s22, 1
      %s404 = scalar_select %p403, %s22, 1
      %p405 = scmp.lt.s32.totalorder %s402, 1
      %s406 = scalar_select %p405, %s402, 1
      %s407 = smul.addr %s404, 2
      %s408 = sadd.s32 %s406, %s407
      %s409 = smul.addr %s408, 8
      %s410 = scalar_lea.vmem %s5, %s409
      // Predicated region
      $region37: #{_rec_loss_forward.2} parent=35 // pred_check
        %p411 = pneg %p157
      $region38: #{_rec_loss_forward.2} parent=35 // pred_check_branch
        %413 = sbr.rel (%p411) target = $region40
      $region39: #{_rec_loss_forward.2} parent=35 // pred_region
        %s414 = smul.u32 2, %s21
      $region40: #{_rec_loss_forward.2} parent=35 // pred_fallthru
        _
      // Predicated region
      $region41: #{_rec_loss_forward.2} parent=35 // pred_check
        %p415 = pneg %p185
      $region42: #{_rec_loss_forward.2} parent=35 // pred_check_branch
        %417 = sbr.rel (%p415) target = $region44
      $region43: #{_rec_loss_forward.2} parent=35 // pred_region
        %s418 = smul.u32 2, %s21
      $region44: #{_rec_loss_forward.2} parent=35 // pred_fallthru
        _
    $region36: #{_rec_loss_forward.2} parent=5 // pred_fallthru
      _
    %p419 = scmp.le.s32.totalorder 2, %s12
    // Predicated region
    $region45: #{_rec_loss_forward.2} parent=5 // pred_check
      %p420 = pneg %p419
    $region46: #{_rec_loss_forward.2} parent=5 // pred_check_branch
      %422 = sbr.rel (%p420) target = $region48
    $region47: #{_rec_loss_forward.2} parent=5 // pred_region
      %s423 = ssub.s32 %s12, 2
      // Predicated region
      $region49: #{_rec_loss_forward.2} parent=47 // pred_check
        %p424 = pneg %p163
      $region50: #{_rec_loss_forward.2} parent=47 // pred_check_branch
        %426 = sbr.rel (%p424) target = $region52
      $region51: #{_rec_loss_forward.2} parent=47 // pred_region
        %s427 = smul.u32 2, %s23
        %p428 = scmp.lt.s32.totalorder %s24, 1
        %s429 = scalar_select %p428, %s24, 1
        %p430 = scmp.lt.s32.totalorder %s427, 1
        %s431 = scalar_select %p430, %s427, 1
        %s432 = smul.addr %s429, 2
        %s433 = sadd.s32 %s431, %s432
        %s434 = smul.addr %s433, 8
        %s435 = scalar_lea.vmem %s4, %s434
      $region52: #{_rec_loss_forward.2} parent=47 // pred_fallthru
        _
      // Predicated region
      $region53: #{_rec_loss_forward.2} parent=47 // pred_check
        %p436 = pneg %p191
      $region54: #{_rec_loss_forward.2} parent=47 // pred_check_branch
        %438 = sbr.rel (%p436) target = $region56
      $region55: #{_rec_loss_forward.2} parent=47 // pred_region
        %s439 = smul.u32 2, %s23
        %p440 = scmp.lt.s32.totalorder %s24, 1
        %s441 = scalar_select %p440, %s24, 1
        %p442 = scmp.lt.s32.totalorder %s439, 1
        %s443 = scalar_select %p442, %s439, 1
        %s444 = smul.addr %s441, 2
        %s445 = sadd.s32 %s443, %s444
        %s446 = smul.addr %s445, 8
        %s447 = scalar_lea.vmem %s5, %s446
      $region56: #{_rec_loss_forward.2} parent=47 // pred_fallthru
        _
    $region48: #{_rec_loss_forward.2} parent=5 // pred_fallthru
      _
  $region6: #{_rec_loss_forward.2} parent=0 // loop_footer
    %s16 = sadd.s32 1, %s12
  $region7: #{_rec_loss_forward.2} parent=0 // loop_footer_branch
    %11 = sbr.rel target = $region3
  $region8: #{_rec_loss_forward.2} parent=0 // loop_exit
    _

// kernel: _rec_loss_forward.3
$region0: #{_rec_loss_forward.3}
  #allocation0 [shape = 'u32[]', space=smem, size = 0x4, offset = 0x4, fixed_abs, tag = 'smem constant byte address 0x4 - core index']
  #allocation1 [shape = 'u32[144,128]{1,0:T(1,128)}', space=vmem, size = 0x12000, scoped, tag = 'internal scratch']
  %s0 = inlined_call_operand.vmem [shape: f32[2,16,16], index: 0, kind: input, shape index: {}]
  %s1 = inlined_call_operand.vmem [shape: f32[2,16,16], index: 1, kind: input, shape index: {}]
  %s2 = inlined_call_operand.vmem [shape: f32[2,16,16], index: 2, kind: input, shape index: {}]
  %s3 = inlined_call_operand.vmem [shape: f32[2,16,16], index: 3, kind: input, shape index: {}]
  %s4 = inlined_call_operand.vmem [shape: f32[2,16,16], index: 4, kind: input, shape index: {}]
  %s5 = inlined_call_operand.vmem [shape: f32[2,1,8,128], index: 5, kind: output, shape index: {}]
  %s6 = sld [smem:[#allocation0]]
  $region53: #{_rec_loss_forward.3} parent=0
    _
  %s8 = ssub.s32 1, %s6
  %s9 = scalar_select 0, %s8, %s6
  loop: start=0, step=1, limit=4
  $region2: #{_rec_loss_forward.3} parent=0 // loop_pre_header
    _
  $region3: #{_rec_loss_forward.3} parent=0 // loop_header
    %s11 = sphi 0, %s15
    %p12 = scmp.ge.s32.totalorder %s11, 4
    %s18 = sphi 0, %s30
    %s19 = sphi 0, %s26
    %s20 = sphi 0, %s18
    %s21 = sphi 0, %s19
    %s22 = sphi 0, %s20
    %s23 = sphi 0, %s21
    %s35 = sphi 0, %s37
    %s38 = sphi 0, %s35
    %s39 = sphi 0, %s38
    %s55 = sphi 0, %s39
    %s63 = sphi 0, %s65
    %s66 = sphi 0, %s63
    %s67 = sphi 0, %s66
    %s83 = sphi 0, %s67
    %s91 = sphi 0, %s93
    %s94 = sphi 0, %s91
    %s95 = sphi 0, %s94
    %s111 = sphi 0, %s95
    %s119 = sphi 0, %s121
    %s122 = sphi 0, %s119
    %s123 = sphi 0, %s122
    %s139 = sphi 0, %s123
    %s147 = sphi 0, %s149
    %s150 = sphi 0, %s147
    %s151 = sphi 0, %s150
    %s167 = sphi 0, %s151
    %s175 = sphi 0, %s177
    %s178 = sphi 0, %s175
    %s179 = sphi 0, %s178
    %s195 = sphi 0, %s179
  $region4: #{_rec_loss_forward.3} parent=0 // loop_header_branch
    %14 = sbr.rel (%p12) target = $region8
  $region5: #{_rec_loss_forward.3} parent=0 // loop_body
    %s16 = ssub.s32 %s11, 1
    %s17 = ssub.s32 %s11, 2
    %s24 = sadd.s32 1, %s19
    %p25 = scmp.ge.s32.totalorder %s24, 1
    %s26 = scalar_select %p25, 0, %s24
    %s27 = sadd.s32 1, %s18
    %s28 = scalar_select %p25, %s27, %s18
    %p29 = scmp.ge.s32.totalorder %s28, 2
    %s30 = scalar_select %p29, 0, %s28
    %s31 = ssub.s32 %s18, %s30
    %s32 = ssub.s32 %s19, %s26
    %s33 = sor.u32 %s31, %s32
    %p34 = scmp.eq.s32.totalorder %s33, 0
    %s36 = sadd.s32 %s35, 1
    %s37 = scalar_select %p34, %s35, %s36
    %p40 = pneg %p34
    %p41 = scmp.eq.s32.totalorder %s11, 1
    %p42 = por %p40, %p41
    %p43 = scmp.ne.s32.totalorder %s35, %s38
    %p44 = scmp.eq.s32.totalorder %s11, 0
    %p45 = por %p43, %p44
    %p46 = scmp.ne.s32.totalorder %s35, %s38
    %p47 = scmp.eq.s32.totalorder %s16, 1
    %p48 = por %p46, %p47
    %p49 = scmp.ne.s32.totalorder %s38, %s39
    %p50 = scmp.eq.s32.totalorder %s16, 0
    %p51 = por %p49, %p50
    %p52 = scmp.ne.s32.totalorder %s38, %s39
    %p53 = scmp.eq.s32.totalorder %s17, 1
    %p54 = por %p52, %p53
    %p56 = scmp.ne.s32.totalorder %s39, %s55
    %p57 = scmp.eq.s32.totalorder %s17, 0
    %p58 = por %p56, %p57
    %s59 = ssub.s32 %s18, %s30
    %s60 = ssub.s32 %s19, %s26
    %s61 = sor.u32 %s59, %s60
    %p62 = scmp.eq.s32.totalorder %s61, 0
    %s64 = sadd.s32 %s63, 1
    %s65 = scalar_select %p62, %s63, %s64
    %p68 = pneg %p62
    %p69 = scmp.eq.s32.totalorder %s11, 1
    %p70 = por %p68, %p69
    %p71 = scmp.ne.s32.totalorder %s63, %s66
    %p72 = scmp.eq.s32.totalorder %s11, 0
    %p73 = por %p71, %p72
    %p74 = scmp.ne.s32.totalorder %s63, %s66
    %p75 = scmp.eq.s32.totalorder %s16, 1
    %p76 = por %p74, %p75
    %p77 = scmp.ne.s32.totalorder %s66, %s67
    %p78 = scmp.eq.s32.totalorder %s16, 0
    %p79 = por %p77, %p78
    %p80 = scmp.ne.s32.totalorder %s66, %s67
    %p81 = scmp.eq.s32.totalorder %s17, 1
    %p82 = por %p80, %p81
    %p84 = scmp.ne.s32.totalorder %s67, %s83
    %p85 = scmp.eq.s32.totalorder %s17, 0
    %p86 = por %p84, %p85
    %s87 = ssub.s32 %s18, %s30
    %s88 = ssub.s32 %s19, %s26
    %s89 = sor.u32 %s87, %s88
    %p90 = scmp.eq.s32.totalorder %s89, 0
    %s92 = sadd.s32 %s91, 1
    %s93 = scalar_select %p90, %s91, %s92
    %p96 = pneg %p90
    %p97 = scmp.eq.s32.totalorder %s11, 1
    %p98 = por %p96, %p97
    %p99 = scmp.ne.s32.totalorder %s91, %s94
    %p100 = scmp.eq.s32.totalorder %s11, 0
    %p101 = por %p99, %p100
    %p102 = scmp.ne.s32.totalorder %s91, %s94
    %p103 = scmp.eq.s32.totalorder %s16, 1
    %p104 = por %p102, %p103
    %p105 = scmp.ne.s32.totalorder %s94, %s95
    %p106 = scmp.eq.s32.totalorder %s16, 0
    %p107 = por %p105, %p106
    %p108 = scmp.ne.s32.totalorder %s94, %s95
    %p109 = scmp.eq.s32.totalorder %s17, 1
    %p110 = por %p108, %p109
    %p112 = scmp.ne.s32.totalorder %s95, %s111
    %p113 = scmp.eq.s32.totalorder %s17, 0
    %p114 = por %p112, %p113
    %s115 = ssub.s32 %s18, %s30
    %s116 = ssub.s32 %s19, %s26
    %s117 = sor.u32 %s115, %s116
    %p118 = scmp.eq.s32.totalorder %s117, 0
    %s120 = sadd.s32 %s119, 1
    %s121 = scalar_select %p118, %s119, %s120
    %p124 = pneg %p118
    %p125 = scmp.eq.s32.totalorder %s11, 1
    %p126 = por %p124, %p125
    %p127 = scmp.ne.s32.totalorder %s119, %s122
    %p128 = scmp.eq.s32.totalorder %s11, 0
    %p129 = por %p127, %p128
    %p130 = scmp.ne.s32.totalorder %s119, %s122
    %p131 = scmp.eq.s32.totalorder %s16, 1
    %p132 = por %p130, %p131
    %p133 = scmp.ne.s32.totalorder %s122, %s123
    %p134 = scmp.eq.s32.totalorder %s16, 0
    %p135 = por %p133, %p134
    %p136 = scmp.ne.s32.totalorder %s122, %s123
    %p137 = scmp.eq.s32.totalorder %s17, 1
    %p138 = por %p136, %p137
    %p140 = scmp.ne.s32.totalorder %s123, %s139
    %p141 = scmp.eq.s32.totalorder %s17, 0
    %p142 = por %p140, %p141
    %s143 = ssub.s32 %s18, %s30
    %s144 = ssub.s32 %s19, %s26
    %s145 = sor.u32 %s143, %s144
    %p146 = scmp.eq.s32.totalorder %s145, 0
    %s148 = sadd.s32 %s147, 1
    %s149 = scalar_select %p146, %s147, %s148
    %p152 = pneg %p146
    %p153 = scmp.eq.s32.totalorder %s11, 1
    %p154 = por %p152, %p153
    %p155 = scmp.ne.s32.totalorder %s147, %s150
    %p156 = scmp.eq.s32.totalorder %s11, 0
    %p157 = por %p155, %p156
    %p158 = scmp.ne.s32.totalorder %s147, %s150
    %p159 = scmp.eq.s32.totalorder %s16, 1
    %p160 = por %p158, %p159
    %p161 = scmp.ne.s32.totalorder %s150, %s151
    %p162 = scmp.eq.s32.totalorder %s16, 0
    %p163 = por %p161, %p162
    %p164 = scmp.ne.s32.totalorder %s150, %s151
    %p165 = scmp.eq.s32.totalorder %s17, 1
    %p166 = por %p164, %p165
    %p168 = scmp.ne.s32.totalorder %s151, %s167
    %p169 = scmp.eq.s32.totalorder %s17, 0
    %p170 = por %p168, %p169
    %s171 = ssub.s32 %s18, %s30
    %s172 = ssub.s32 %s19, %s26
    %s173 = sor.u32 %s171, %s172
    %p174 = scmp.eq.s32.totalorder %s173, 0
    %s176 = sadd.s32 %s175, 1
    %s177 = scalar_select %p174, %s175, %s176
    %p180 = pneg %p174
    %p181 = scmp.eq.s32.totalorder %s11, 1
    %p182 = por %p180, %p181
    %p183 = scmp.ne.s32.totalorder %s175, %s178
    %p184 = scmp.eq.s32.totalorder %s11, 0
    %p185 = por %p183, %p184
    %p186 = scmp.ne.s32.totalorder %s175, %s178
    %p187 = scmp.eq.s32.totalorder %s16, 1
    %p188 = por %p186, %p187
    %p189 = scmp.ne.s32.totalorder %s178, %s179
    %p190 = scmp.eq.s32.totalorder %s16, 0
    %p191 = por %p189, %p190
    %p192 = scmp.ne.s32.totalorder %s178, %s179
    %p193 = scmp.eq.s32.totalorder %s17, 1
    %p194 = por %p192, %p193
    %p196 = scmp.ne.s32.totalorder %s179, %s195
    %p197 = scmp.eq.s32.totalorder %s17, 0
    %p198 = por %p196, %p197
    %p199 = scmp.le.s32.totalorder 1, %s11
    %p200 = scmp.lt.s32.totalorder %s11, 3
    %p201 = pnand %p199, %p200
    %p202 = pneg %p201
    // Predicated region
    $region9: #{_rec_loss_forward.3} parent=5 // pred_check
      _
    $region10: #{_rec_loss_forward.3} parent=5 // pred_check_branch
      %204 = sbr.rel (%p201) target = $region12
    $region11: #{_rec_loss_forward.3} parent=5 // pred_region
      %s205 = ssub.s32 %s11, 1
    $region12: #{_rec_loss_forward.3} parent=5 // pred_fallthru
      _
    %p206 = scmp.lt.s32.totalorder %s11, 2
    // Predicated region
    $region13: #{_rec_loss_forward.3} parent=5 // pred_check
      %p207 = pneg %p206
    $region14: #{_rec_loss_forward.3} parent=5 // pred_check_branch
      %209 = sbr.rel (%p207) target = $region16
    $region15: #{_rec_loss_forward.3} parent=5 // pred_region
      // Predicated region
      $region17: #{_rec_loss_forward.3} parent=15 // pred_check
        %p210 = pneg %p45
      $region18: #{_rec_loss_forward.3} parent=15 // pred_check_branch
        %212 = sbr.rel (%p210) target = $region20
      $region19: #{_rec_loss_forward.3} parent=15 // pred_region
        %s213 = smul.u32 2, %s19
        %p214 = scmp.lt.s32.totalorder %s18, 1
        %s215 = scalar_select %p214, %s18, 1
        %p216 = scmp.lt.s32.totalorder %s213, 1
        %s217 = scalar_select %p216, %s213, 1
        %s218 = smul.addr %s215, 2
        %s219 = sadd.s32 %s217, %s218
        %s220 = smul.addr %s219, 8
        %s221 = scalar_lea.vmem %s0, %s220
        %s222 = smul.u32 2, %s19
      $region20: #{_rec_loss_forward.3} parent=15 // pred_fallthru
        _
      // Predicated region
      $region21: #{_rec_loss_forward.3} parent=15 // pred_check
        %p223 = pneg %p73
      $region22: #{_rec_loss_forward.3} parent=15 // pred_check_branch
        %225 = sbr.rel (%p223) target = $region24
      $region23: #{_rec_loss_forward.3} parent=15 // pred_region
        %s226 = smul.u32 2, %s19
        %p227 = scmp.lt.s32.totalorder %s18, 1
        %s228 = scalar_select %p227, %s18, 1
        %p229 = scmp.lt.s32.totalorder %s226, 1
        %s230 = scalar_select %p229, %s226, 1
        %s231 = smul.addr %s228, 2
        %s232 = sadd.s32 %s230, %s231
        %s233 = smul.addr %s232, 8
        %s234 = scalar_lea.vmem %s1, %s233
        %s235 = smul.u32 2, %s19
      $region24: #{_rec_loss_forward.3} parent=15 // pred_fallthru
        _
      // Predicated region
      $region25: #{_rec_loss_forward.3} parent=15 // pred_check
        %p236 = pneg %p101
      $region26: #{_rec_loss_forward.3} parent=15 // pred_check_branch
        %238 = sbr.rel (%p236) target = $region28
      $region27: #{_rec_loss_forward.3} parent=15 // pred_region
        %s239 = smul.u32 2, %s19
        %p240 = scmp.lt.s32.totalorder %s18, 1
        %s241 = scalar_select %p240, %s18, 1
        %p242 = scmp.lt.s32.totalorder %s239, 1
        %s243 = scalar_select %p242, %s239, 1
        %s244 = smul.addr %s241, 2
        %s245 = sadd.s32 %s243, %s244
        %s246 = smul.addr %s245, 8
        %s247 = scalar_lea.vmem %s2, %s246
        %s248 = smul.u32 2, %s19
      $region28: #{_rec_loss_forward.3} parent=15 // pred_fallthru
        _
      // Predicated region
      $region29: #{_rec_loss_forward.3} parent=15 // pred_check
        %p249 = pneg %p129
      $region30: #{_rec_loss_forward.3} parent=15 // pred_check_branch
        %251 = sbr.rel (%p249) target = $region32
      $region31: #{_rec_loss_forward.3} parent=15 // pred_region
        %s252 = smul.u32 2, %s19
        %p253 = scmp.lt.s32.totalorder %s18, 1
        %s254 = scalar_select %p253, %s18, 1
        %p255 = scmp.lt.s32.totalorder %s252, 1
        %s256 = scalar_select %p255, %s252, 1
        %s257 = smul.addr %s254, 2
        %s258 = sadd.s32 %s256, %s257
        %s259 = smul.addr %s258, 8
        %s260 = scalar_lea.vmem %s3, %s259
        %s261 = smul.u32 2, %s19
      $region32: #{_rec_loss_forward.3} parent=15 // pred_fallthru
        _
      // Predicated region
      $region33: #{_rec_loss_forward.3} parent=15 // pred_check
        %p262 = pneg %p157
      $region34: #{_rec_loss_forward.3} parent=15 // pred_check_branch
        %264 = sbr.rel (%p262) target = $region36
      $region35: #{_rec_loss_forward.3} parent=15 // pred_region
        %s265 = smul.u32 2, %s19
        %p266 = scmp.lt.s32.totalorder %s18, 1
        %s267 = scalar_select %p266, %s18, 1
        %p268 = scmp.lt.s32.totalorder %s265, 1
        %s269 = scalar_select %p268, %s265, 1
        %s270 = smul.addr %s267, 2
        %s271 = sadd.s32 %s269, %s270
        %s272 = smul.addr %s271, 8
        %s273 = scalar_lea.vmem %s4, %s272
        %s274 = smul.u32 2, %s19
      $region36: #{_rec_loss_forward.3} parent=15 // pred_fallthru
        _
    $region16: #{_rec_loss_forward.3} parent=5 // pred_fallthru
      _
    %p275 = scmp.le.s32.totalorder 1, %s11
    %p276 = scmp.lt.s32.totalorder %s11, 3
    %p277 = pnand %p275, %p276
    %p278 = pneg %p277
    // Predicated region
    $region37: #{_rec_loss_forward.3} parent=5 // pred_check
      _
    $region38: #{_rec_loss_forward.3} parent=5 // pred_check_branch
      %280 = sbr.rel (%p277) target = $region40
    $region39: #{_rec_loss_forward.3} parent=5 // pred_region
      %s281 = ssub.s32 %s11, 1
      %s282 = smul.u32 2, %s21
      %p283 = scmp.lt.s32.totalorder %s20, 1
      %s284 = scalar_select %p283, %s20, 1
      %p285 = scmp.lt.s32.totalorder %s282, 1
      %s286 = scalar_select %p285, %s282, 1
      %s287 = smul.addr %s284, 2
      %s288 = sadd.s32 %s286, %s287
      %s289 = smul.addr %s288, 8
      %s290 = scalar_lea.vmem %s0, %s289
      %p291 = pneg %p51
      %p292 = pneg %p48
      %s293 = smul.u32 2, %s21
      %p294 = scmp.lt.s32.totalorder %s20, 1
      %s295 = scalar_select %p294, %s20, 1
      %p296 = scmp.lt.s32.totalorder %s293, 1
      %s297 = scalar_select %p296, %s293, 1
      %s298 = smul.addr %s295, 2
      %s299 = sadd.s32 %s297, %s298
      %s300 = smul.addr %s299, 8
      %s301 = scalar_lea.vmem %s1, %s300
      %p302 = pneg %p79
      %p303 = pneg %p76
      %s304 = smul.u32 2, %s21
      %p305 = scmp.lt.s32.totalorder %s20, 1
      %s306 = scalar_select %p305, %s20, 1
      %p307 = scmp.lt.s32.totalorder %s304, 1
      %s308 = scalar_select %p307, %s304, 1
      %s309 = smul.addr %s306, 2
      %s310 = sadd.s32 %s308, %s309
      %s311 = smul.addr %s310, 8
      %s312 = scalar_lea.vmem %s2, %s311
      %p313 = pneg %p107
      %p314 = pneg %p104
      %s315 = smul.u32 2, %s21
      %p316 = scmp.lt.s32.totalorder %s20, 1
      %s317 = scalar_select %p316, %s20, 1
      %p318 = scmp.lt.s32.totalorder %s315, 1
      %s319 = scalar_select %p318, %s315, 1
      %s320 = smul.addr %s317, 2
      %s321 = sadd.s32 %s319, %s320
      %s322 = smul.addr %s321, 8
      %s323 = scalar_lea.vmem %s3, %s322
      %p324 = pneg %p135
      %p325 = pneg %p132
      %s326 = smul.u32 2, %s21
      %p327 = scmp.lt.s32.totalorder %s20, 1
      %s328 = scalar_select %p327, %s20, 1
      %p329 = scmp.lt.s32.totalorder %s326, 1
      %s330 = scalar_select %p329, %s326, 1
      %s331 = smul.addr %s328, 2
      %s332 = sadd.s32 %s330, %s331
      %s333 = smul.addr %s332, 8
      %s334 = scalar_lea.vmem %s4, %s333
      %p335 = pneg %p163
      %p336 = pneg %p160
      %p337 = pneg %p191
      %p338 = pneg %p188
      %p339 = scmp.lt.s32.totalorder %s20, 1
      %s340 = scalar_select %p339, %s20, 1
      %p341 = scmp.lt.s32.totalorder %s21, 0
      %s342 = scalar_select %p341, %s21, 0
      %s343 = sadd.s32 %s342, %s340
      %s344 = smul.addr %s343, 8
      %s345 = scalar_lea.vmem %s5, %s344
      %s346 = smul.u32 2, %s21
      %p347 = scmp.lt.s32.totalorder %s20, 1
      %s348 = scalar_select %p347, %s20, 1
      %p349 = scmp.lt.s32.totalorder %s346, 1
      %s350 = scalar_select %p349, %s346, 1
      %s351 = smul.addr %s348, 2
      %s352 = sadd.s32 %s350, %s351
      %s353 = smul.addr %s352, 8
      %s354 = scalar_lea.vmem %s0, %s353
      %s355 = smul.u32 2, %s21
      %s356 = smul.u32 2, %s21
      %p357 = scmp.lt.s32.totalorder %s20, 1
      %s358 = scalar_select %p357, %s20, 1
      %p359 = scmp.lt.s32.totalorder %s356, 1
      %s360 = scalar_select %p359, %s356, 1
      %s361 = smul.addr %s358, 2
      %s362 = sadd.s32 %s360, %s361
      %s363 = smul.addr %s362, 8
      %s364 = scalar_lea.vmem %s1, %s363
      %s365 = smul.u32 2, %s21
      %s366 = smul.u32 2, %s21
      %p367 = scmp.lt.s32.totalorder %s20, 1
      %s368 = scalar_select %p367, %s20, 1
      %p369 = scmp.lt.s32.totalorder %s366, 1
      %s370 = scalar_select %p369, %s366, 1
      %s371 = smul.addr %s368, 2
      %s372 = sadd.s32 %s370, %s371
      %s373 = smul.addr %s372, 8
      %s374 = scalar_lea.vmem %s2, %s373
      %s375 = smul.u32 2, %s21
      %s376 = smul.u32 2, %s21
      %p377 = scmp.lt.s32.totalorder %s20, 1
      %s378 = scalar_select %p377, %s20, 1
      %p379 = scmp.lt.s32.totalorder %s376, 1
      %s380 = scalar_select %p379, %s376, 1
      %s381 = smul.addr %s378, 2
      %s382 = sadd.s32 %s380, %s381
      %s383 = smul.addr %s382, 8
      %s384 = scalar_lea.vmem %s3, %s383
      %s385 = smul.u32 2, %s21
      %s386 = smul.u32 2, %s21
      %p387 = scmp.lt.s32.totalorder %s20, 1
      %s388 = scalar_select %p387, %s20, 1
      %p389 = scmp.lt.s32.totalorder %s386, 1
      %s390 = scalar_select %p389, %s386, 1
      %s391 = smul.addr %s388, 2
      %s392 = sadd.s32 %s390, %s391
      %s393 = smul.addr %s392, 8
      %s394 = scalar_lea.vmem %s4, %s393
      %s395 = smul.u32 2, %s21
      %p396 = scmp.lt.s32.totalorder %s20, 1
      %s397 = scalar_select %p396, %s20, 1
      %p398 = scmp.lt.s32.totalorder %s21, 0
      %s399 = scalar_select %p398, %s21, 0
      %s400 = sadd.s32 %s399, %s397
      %s401 = smul.addr %s400, 8
      %s402 = scalar_lea.vmem %s5, %s401
      %v403 = vld [vmem:[%s354] sm:$0xff]
      %v404 = vld [vmem:[%s354 + $0x8] sm:$0xff]
      %v405 = vld [vmem:[%s364] sm:$0xff]
      %v406 = vld [vmem:[%s364 + $0x8] sm:$0xff]
      %v407 = vld [vmem:[%s374] sm:$0xff]
      %v408 = vld [vmem:[%s374 + $0x8] sm:$0xff]
      %v409 = vmul.f32 %v403, %v403
      %v410 = vmul.f32 %v404, %v404
      %v411 = vmul.f32 %v405, %v405
      %v412 = vmul.f32 %v406, %v406
      %v413 = vadd.f32 %v409, %v411
      %v414 = vadd.f32 %v410, %v412
      %v415 = vrsqrt.pop %v413
      %v416 = vmul.f32 %v413, %v415
      %vm417 = vcmp.eq.f32.partialorder %v413, inf
      %v418 = vsel %vm417, %v413, %v416
      %vm419 = vcmp.eq.f32.partialorder %v413, 0.0
      %v420 = vand.u32 %v413, 2147483648
      %v421 = vsel %vm419, %v420, %v418
      %v422 = vrsqrt.pop %v414
      %v423 = vmul.f32 %v414, %v422
      %vm424 = vcmp.eq.f32.partialorder %v414, inf
      %v425 = vsel %vm424, %v414, %v423
      %vm426 = vcmp.eq.f32.partialorder %v414, 0.0
      %v427 = vand.u32 %v414, 2147483648
      %v428 = vsel %vm426, %v427, %v425
      %v429 = vrsqrt.pop %v407
      %v430 = vmul.f32 %v407, %v429
      %vm431 = vcmp.eq.f32.partialorder %v407, inf
      %v432 = vsel %vm431, %v407, %v430
      %vm433 = vcmp.eq.f32.partialorder %v407, 0.0
      %v434 = vand.u32 %v407, 2147483648
      %v435 = vsel %vm433, %v434, %v432
      %v436 = vrsqrt.pop %v408
      %v437 = vmul.f32 %v408, %v436
      %vm438 = vcmp.eq.f32.partialorder %v408, inf
      %v439 = vsel %vm438, %v408, %v437
      %vm440 = vcmp.eq.f32.partialorder %v408, 0.0
      %v441 = vand.u32 %v408, 2147483648
      %v442 = vsel %vm440, %v441, %v439
      %v443 = vsub.f32 %v421, %v435
      %v444 = vsub.f32 %v428, %v442
      %v445 = vand.u32 2147483647, %v443
      %v446 = vand.u32 2147483647, %v444
      %vm447 = vcmask 130048
      %v448 = vsel %vm447, %v445, 0.0
      %v449 = vsel %vm447, %v446, 0.0
      %v450 = vadd.f32 %v448, %v449
      %451 = vadd.xlane.f32.xlu0 %v450
      %v452 = vpop.xlane.xlu0 %451
      %v453 = vrot.slane %v452, 4
      %v454 = vadd.f32 %v452, %v453
      %v455 = vrot.slane %v454, 2
      %v456 = vadd.f32 %v454, %v455
      %v457 = vrot.slane %v456, 1
      %v458 = vadd.f32 %v456, %v457
      %s459 = vtos %v458
      %v460 = vld [vmem:[%s384] sm:$0xff]
      %v461 = vld [vmem:[%s384 + $0x8] sm:$0xff]
      %v462 = vld [vmem:[%s394] sm:$0xff]
      %v463 = vld [vmem:[%s394 + $0x8] sm:$0xff]
      %v464 = vrot.slane %v460, 7
      %v465 = vrot.slane %v461, 7
      %v466 = vlaneseq
      %v467 = vshrl.u32 %v466, 7
      %vm468 = vcmp.lt.s32.totalorder %v467, 1
      %v469 = vsel %vm468, %v464, %v465
      %v470 = vsel %vm468, %v465, %v464
      %v471 = vsub.f32 %v470, %v460
      %v472 = vsub.f32 %v469, %v461
      %v474 = vrot.slane %v461, 7
      %v476 = vsub.f32 %v460, %v474
      %v477 = vmul.f32 %v471, %v471
      %v478 = vmul.f32 %v472, %v472
      %v479 = vsel %vm447, %v477, 0.0
      %v480 = vsel %vm447, %v478, 0.0
      %v481 = vadd.f32 %v479, %v480
      %482 = vadd.xlane.f32.xlu0 %v481
      %v483 = vpop.xlane.xlu0 %482
      %v484 = vrot.slane %v483, 4
      %v485 = vadd.f32 %v483, %v484
      %v486 = vrot.slane %v485, 2
      %v487 = vadd.f32 %v485, %v486
      %v488 = vrot.slane %v487, 1
      %v489 = vadd.f32 %v487, %v488
      %s490 = vtos %v489
      %v491 = vmul.f32 %v476, %v476
      %vm492 = vcmask 122880
      %v493 = vsel %vm492, %v491, 0.0
      %494 = vadd.xlane.f32.xlu0 %v493
      %v495 = vpop.xlane.xlu0 %494
      %v496 = vrot.slane %v495, 4
      %v497 = vadd.f32 %v495, %v496
      %v498 = vrot.slane %v497, 2
      %v499 = vadd.f32 %v497, %v498
      %v500 = vrot.slane %v499, 1
      %v501 = vadd.f32 %v499, %v500
      %s502 = vtos %v501
      %s503 = ssub.f32 %s490, %s502
      %v504 = vrot.slane %v462, 7
      %v505 = vrot.slane %v463, 7
      %v506 = vsel %vm468, %v504, %v505
      %v507 = vsel %vm468, %v505, %v504
      %v508 = vsub.f32 %v507, %v462
      %v509 = vsub.f32 %v506, %v463
      %v511 = vrot.slane %v463, 7
      %v513 = vsub.f32 %v462, %v511
      %v514 = vmul.f32 %v508, %v508
      %v515 = vmul.f32 %v509, %v509
      %v516 = vsel %vm447, %v514, 0.0
      %v517 = vsel %vm447, %v515, 0.0
      %v518 = vadd.f32 %v516, %v517
      %519 = vadd.xlane.f32.xlu0 %v518
      %v520 = vpop.xlane.xlu0 %519
      %v521 = vrot.slane %v520, 4
      %v522 = vadd.f32 %v520, %v521
      %v523 = vrot.slane %v522, 2
      %v524 = vadd.f32 %v522, %v523
      %v525 = vrot.slane %v524, 1
      %v526 = vadd.f32 %v524, %v525
      %s527 = vtos %v526
      %v528 = vmul.f32 %v513, %v513
      %v529 = vsel %vm492, %v528, 0.0
      %530 = vadd.xlane.f32.xlu0 %v529
      %v531 = vpop.xlane.xlu0 %530
      %v532 = vrot.slane %v531, 4
      %v533 = vadd.f32 %v531, %v532
      %v534 = vrot.slane %v533, 2
      %v535 = vadd.f32 %v533, %v534
      %v536 = vrot.slane %v535, 1
      %v537 = vadd.f32 %v535, %v536
      %s538 = vtos %v537
      %s539 = ssub.f32 %s527, %s538
      %s540 = sadd.f32 %s503, %s539
      %542 = vset.pattern.permute.xlu0 0
      %543 = vperm.xlu0 %542, %v460
      %v544 = vpop.permute.xlu0 %543
      %546 = vset.pattern.permute.xlu0 0
      %547 = vperm.xlu0 %546, %v461
      %v548 = vpop.permute.xlu0 %547
      %v550 = vsub.f32 %v460, %v544
      %v551 = vsub.f32 %v461, %v548
      %v552 = vmul.f32 %v550, %v550
      %v553 = vmul.f32 %v551, %v551
      %v554 = vsel %vm447, %v552, 0.0
      %v555 = vsel %vm447, %v553, 0.0
      %v556 = vadd.f32 %v554, %v555
      %557 = vadd.xlane.f32.xlu0 %v556
      %v558 = vpop.xlane.xlu0 %557
      %v559 = vrot.slane %v558, 4
      %v560 = vadd.f32 %v558, %v559
      %v561 = vrot.slane %v560, 2
      %v562 = vadd.f32 %v560, %v561
      %v563 = vrot.slane %v562, 1
      %v564 = vadd.f32 %v562, %v563
      %s565 = vtos %v564
      %567 = vset.pattern.permute.xlu0 0
      %568 = vperm.xlu0 %567, %v462
      %v569 = vpop.permute.xlu0 %568
      %571 = vset.pattern.permute.xlu0 0
      %572 = vperm.xlu0 %571, %v463
      %v573 = vpop.permute.xlu0 %572
      %v575 = vsub.f32 %v462, %v569
      %v576 = vsub.f32 %v463, %v573
      %v577 = vmul.f32 %v575, %v575
      %v578 = vmul.f32 %v576, %v576
      %v579 = vsel %vm447, %v577, 0.0
      %v580 = vsel %vm447, %v578, 0.0
      %v581 = vadd.f32 %v579, %v580
      %582 = vadd.xlane.f32.xlu0 %v581
      %v583 = vpop.xlane.xlu0 %582
      %v584 = vrot.slane %v583, 4
      %v585 = vadd.f32 %v583, %v584
      %v586 = vrot.slane %v585, 2
      %v587 = vadd.f32 %v585, %v586
      %v588 = vrot.slane %v587, 1
      %v589 = vadd.f32 %v587, %v588
      %s590 = vtos %v589
      %s591 = sadd.f32 %s565, %s590
      %vm592 = vcmp.eq.s32.totalorder %v467, 0
      %vm593 = vcmp.eq.s32.totalorder %v467, 1
      %vm594 = vcmp.eq.s32.totalorder %v467, 2
      %v595 = vstv %s591
      %v596 = vsel %vm594, %v595, 0.0
      %v597 = vstv %s540
      %v598 = vsel %vm593, %v597, %v596
      %v599 = vstv %s459
      %v600 = vsel %vm592, %v599, %v598
      %601 = vst [vmem:[%s402] sm:$0xff] %v600
      %p602 = scmp.lt.s32.totalorder %s20, 1
      %s603 = scalar_select %p602, %s20, 1
      %p604 = scmp.lt.s32.totalorder %s21, 0
      %s605 = scalar_select %p604, %s21, 0
      %s606 = sadd.s32 %s605, %s603
      %s607 = smul.addr %s606, 8
      %s608 = scalar_lea.vmem %s5, %s607
      // Predicated region
      $region41: #{_rec_loss_forward.3} parent=39 // pred_check
        %p609 = pneg %p188
      $region42: #{_rec_loss_forward.3} parent=39 // pred_check_branch
        %611 = sbr.rel (%p609) target = $region44
      $region43: #{_rec_loss_forward.3} parent=39 // pred_region
        _
      $region44: #{_rec_loss_forward.3} parent=39 // pred_fallthru
        _
    $region40: #{_rec_loss_forward.3} parent=5 // pred_fallthru
      _
    %p612 = scmp.le.s32.totalorder 2, %s11
    // Predicated region
    $region45: #{_rec_loss_forward.3} parent=5 // pred_check
      %p613 = pneg %p612
    $region46: #{_rec_loss_forward.3} parent=5 // pred_check_branch
      %615 = sbr.rel (%p613) target = $region48
    $region47: #{_rec_loss_forward.3} parent=5 // pred_region
      %s616 = ssub.s32 %s11, 2
      // Predicated region
      $region49: #{_rec_loss_forward.3} parent=47 // pred_check
        %p617 = pneg %p194
      $region50: #{_rec_loss_forward.3} parent=47 // pred_check_branch
        %619 = sbr.rel (%p617) target = $region52
      $region51: #{_rec_loss_forward.3} parent=47 // pred_region
        %p620 = scmp.lt.s32.totalorder %s22, 1
        %s621 = scalar_select %p620, %s22, 1
        %p622 = scmp.lt.s32.totalorder %s23, 0
        %s623 = scalar_select %p622, %s23, 0
        %s624 = sadd.s32 %s623, %s621
        %s625 = smul.addr %s624, 8
        %s626 = scalar_lea.vmem %s5, %s625
      $region52: #{_rec_loss_forward.3} parent=47 // pred_fallthru
        _
    $region48: #{_rec_loss_forward.3} parent=5 // pred_fallthru
      _
  $region6: #{_rec_loss_forward.3} parent=0 // loop_footer
    %s15 = sadd.s32 1, %s11
  $region7: #{_rec_loss_forward.3} parent=0 // loop_footer_branch
    %10 = sbr.rel target = $region3
  $region8: #{_rec_loss_forward.3} parent=0 // loop_exit
    _

</llo_original>
